<compile_context>
chip_gen: v7x
topology: tpu7x:2x2x1
jax: 0.10.0
libtpu: 0.0.40
codegen_flags: <defaults>
</compile_context>

<pallas_src>
import functools

import jax
import jax.numpy as jnp
from jax.experimental import pallas as pl
from jax.experimental.pallas import tpu as pltpu


def vassert(cond, msg):
    if not cond:
        raise ValueError(msg)


# ----------------------------------------------------------------------------
# Base class: direct port of torch_fidelity.feature_extractor_base
# ----------------------------------------------------------------------------
class FeatureExtractorBase:
    def __init__(self, name, features_list):
        vassert(type(name) is str, 'Feature extractor name must be a string')
        vassert(type(features_list) in (list, tuple), 'Wrong features list type')
        vassert(
            all(a in self.get_provided_features_list() for a in features_list),
            'Requested features are not on the list of provided',
        )
        vassert(len(features_list) == len(set(features_list)), 'Duplicate features requested')
        self.name = name
        self.features_list = features_list

    def get_name(self):
        return self.name

    @staticmethod
    def get_provided_features_list():
        raise NotImplementedError

    def get_requested_features_list(self):
        return self.features_list

    def convert_features_tuple_to_dict(self, features):
        vassert(
            type(features) is tuple and len(features) == len(self.features_list),
            'Features must be the output of forward function',
        )
        return dict((name, feature) for name, feature in zip(self.features_list, features))

    def forward(self, x):
        # TODO(synk): abstract in the original module (raises NotImplementedError);
        # concrete compute lives in subclasses (see DemoPallasFeatureExtractor below).
        raise NotImplementedError

    def __call__(self, x):
        return self.forward(x)


# ----------------------------------------------------------------------------
# Tiling helpers
# ----------------------------------------------------------------------------
def _round_up(x, m):
    return ((x + m - 1) // m) * m


def _tpu_vmem_capacity_bytes():
    # Trace-time hardware query; fall back to the v5e/v6e capacity if the
    # query is unavailable on this backend/version.
    try:
        return int(pltpu.get_tpu_info().vmem_capacity_bytes)
    except Exception:
        return 128 * 1024 * 1024


def _plan_tiling(rows, hw, itemsize, stream_budget_bytes):
    """Pick (tile_rows, hw_chunk) so that 2 * tile_rows * hw_chunk * itemsize
    (double-buffered input stream) stays within stream_budget_bytes."""
    granule = max(8, 32 // itemsize)              # sublane packing granule per dtype
    per_buf = max(1, stream_budget_bytes // 2)    # bytes per input buffer

    rows_fit = per_buf // max(1, hw * itemsize)
    if rows_fit >= granule:
        # The whole spatial extent fits within a row tile: no HW chunking.
        hw_chunk = hw
        tile_rows = min(rows_fit, _round_up(rows, granule))
        tile_rows = max(granule, (tile_rows // granule) * granule)
    else:
        # H*W too large for even one sublane granule of rows: chunk the lane axis.
        tile_rows = granule
        hw_chunk = (per_buf // (tile_rows * itemsize)) // 128 * 128
        hw_chunk = max(128, hw_chunk)
        hw_chunk = min(hw_chunk, _round_up(hw, 128))
    return tile_rows, hw_chunk


# ----------------------------------------------------------------------------
# Pallas kernel: streaming per-row (row = one (batch, channel) pair) spatial
# mean and max, reduced over lane chunks with f32 accumulators in scratch.
# ----------------------------------------------------------------------------
def _pool_kernel(x_ref, out_ref, sum_acc, max_acc, *, inv_hw, hw, hw_chunk, mask_last):
    j = pl.program_id(1)

    @pl.when(j == 0)
    def _init():
        sum_acc[...] = jnp.zeros_like(sum_acc)
        max_acc[...] = jnp.full_like(max_acc, -jnp.inf)

    x = x_ref[...]                      # (tile_rows, hw_chunk) in input dtype
    if mask_last:
        # Ragged last lane chunk: neutralize out-of-bounds lanes.
        lane = jax.lax.broadcasted_iota(jnp.int32, x.shape, 1)
        valid = lane < (hw - j * hw_chunk)
        x_sum = jnp.where(valid, x, jnp.zeros((), x.dtype))
        x_max = jnp.where(valid, x, jnp.full((), -jnp.inf, x.dtype))
    else:
        x_sum = x
        x_max = x

    # f32 accumulation for the sum; max is exact in the input dtype.
    sum_acc[...] += jnp.sum(x_sum, axis=-1, keepdims=True, dtype=jnp.float32)
    max_acc[...] = jnp.maximum(
        max_acc[...], jnp.max(x_max, axis=-1, keepdims=True).astype(jnp.float32))

    @pl.when(j == pl.num_programs(1) - 1)
    def _finalize():
        out_ref[:, 0:1] = sum_acc[...] * inv_hw
        out_ref[:, 1:2] = max_acc[...]


def pallas_spatial_pool(x_nchw, *, stream_budget_bytes=None, vmem_limit_bytes=None):
    """x_nchw: (B, C, H, W) float32/bfloat16 -> (mean (B,C) f32, max (B,C) f32)."""
    B, C, H, W = x_nchw.shape
    HW = H * W
    rows = B * C
    itemsize = jnp.dtype(x_nchw.dtype).itemsize
    granule = max(8, 32 // itemsize)

    vmem_cap = _tpu_vmem_capacity_bytes()
    small_vmem = vmem_cap <= 64 * 1024 * 1024     # v7x-class: 64 MiB VMEM per TC

    if stream_budget_bytes is None:
        stream_budget_bytes = (16 if small_vmem else 32) * 1024 * 1024
    if vmem_limit_bytes is None:
        vmem_limit_bytes = (48 if small_vmem else 64) * 1024 * 1024

    tile_rows, hw_chunk = _plan_tiling(rows, HW, itemsize, stream_budget_bytes)

    # v7x has 2 TensorCores: keep >= 4 row tiles on the "parallel" axis when the
    # row count allows, so both cores stream from HBM.
    if small_vmem and hw_chunk == HW and rows >= 4 * granule:
        tile_rows = min(tile_rows, _round_up(pl.cdiv(rows, 4), granule))

    num_row_tiles = pl.cdiv(rows, tile_rows)
    num_hw_chunks = pl.cdiv(HW, hw_chunk)
    mask_last = (HW % hw_chunk) != 0

    # No padding copy: HW maps to the lane axis; the ragged last row block is
    # handled by Pallas (per-row reduction, only in-bounds rows written back).
    x_flat = x_nchw.reshape(rows, HW)

    kernel = functools.partial(
        _pool_kernel, inv_hw=float(1.0 / HW), hw=HW, hw_chunk=hw_chunk, mask_last=mask_last)

    out = pl.pallas_call(
        kernel,
        out_shape=jax.ShapeDtypeStruct((rows, 2), jnp.float32),
        grid=(num_row_tiles, num_hw_chunks),
        in_specs=[pl.BlockSpec((tile_rows, hw_chunk), lambda i, j: (i, j))],
        out_specs=pl.BlockSpec((tile_rows, 2), lambda i, j: (i, 0)),
        scratch_shapes=[
            pltpu.VMEM((tile_rows, 1), jnp.float32),   # running sum
            pltpu.VMEM((tile_rows, 1), jnp.float32),   # running max
        ],
        compiler_params=pltpu.CompilerParams(
            dimension_semantics=("parallel", "arbitrary"),
            vmem_limit_bytes=vmem_limit_bytes,
        ),
    )(x_flat)

    mean = out[:, 0].reshape(B, C)
    mx = out[:, 1].reshape(B, C)
    return mean, mx


# ----------------------------------------------------------------------------
# Minimal concrete subclass exercising the base-class machinery with the
# Pallas hot path.
# ----------------------------------------------------------------------------
class DemoPallasFeatureExtractor(FeatureExtractorBase):
    @staticmethod
    def get_provided_features_list():
        return ('spatial_mean', 'spatial_max')

    def forward(self, x):
        vassert(x.ndim == 4, 'Input must be NCHW')
        mean_feat, max_feat = pallas_spatial_pool(x)
        out = []
        for name in self.features_list:
            if name == 'spatial_mean':
                out.append(mean_feat)
            elif name == 'spatial_max':
                out.append(max_feat)
        return tuple(out)


if __name__ == "__main__":
    key = jax.random.PRNGKey(0)
    B, C, H, W = 2, 4, 16, 16
    x_f32 = jax.random.normal(key, (B, C, H, W), dtype=jnp.float32)
    # bf16 end-to-end in HBM (halves the memory-bound DMA stream); f32 accum in-kernel.
    x_bf16 = x_f32.astype(jnp.bfloat16)

    extractor = DemoPallasFeatureExtractor('demo-pallas', ('spatial_mean', 'spatial_max'))

    feats_tuple = extractor(x_bf16)
    feats_tuple = jax.block_until_ready(feats_tuple)
    feats_dict = extractor.convert_features_tuple_to_dict(feats_tuple)

    # sanity check against plain-JAX reference (bf16 path, ragged row block, no pad)
    x_up = x_bf16.astype(jnp.float32)
    ref_mean = jnp.mean(x_up, axis=(2, 3))
    ref_max = jnp.max(x_up, axis=(2, 3))
    assert feats_dict['spatial_mean'].shape == (B, C)
    assert feats_dict['spatial_max'].shape == (B, C)
    assert jnp.allclose(feats_dict['spatial_mean'], ref_mean, atol=1e-3, rtol=1e-3)
    assert jnp.allclose(feats_dict['spatial_max'], ref_max, atol=1e-6)

    # f32 path (exercises the f32 sublane granule)
    m32, mx32 = pallas_spatial_pool(x_f32)
    jax.block_until_ready((m32, mx32))
    assert jnp.allclose(m32, jnp.mean(x_f32, axis=(2, 3)), atol=1e-5)
    assert jnp.allclose(mx32, jnp.max(x_f32, axis=(2, 3)), atol=1e-6)

    # HW-chunked ("arbitrary" axis) path with a ragged, masked last lane chunk,
    # forced at a small shape by shrinking the streaming budget.
    Hc, Wc = 16, 12   # HW = 192 -> 128-lane chunk + masked 64-lane tail
    x_chunk = jax.random.normal(jax.random.PRNGKey(0), (B, C, Hc, Wc), dtype=jnp.float32)
    mch, mxch = pallas_spatial_pool(x_chunk, stream_budget_bytes=8 * 1024)
    jax.block_until_ready((mch, mxch))
    assert jnp.allclose(mch, jnp.mean(x_chunk, axis=(2, 3)), atol=1e-5)
    assert jnp.allclose(mxch, jnp.max(x_chunk, axis=(2, 3)), atol=1e-6)

    assert extractor.get_name() == 'demo-pallas'
    assert extractor.get_requested_features_list() == ('spatial_mean', 'spatial_max')

    print("KERNEL_OK")
</pallas_src>

<mosaic_0001>
module attributes {stable_mosaic.version = 11 : i64} {
  func.func @_pool_kernel(%arg0: i32, %arg1: i32, %arg2: memref<16x256xbf16, #tpu.memory_space<vmem>>, %arg3: memref<16x2xf32, #tpu.memory_space<vmem>>, %arg4: memref<16x1xf32, #tpu.memory_space<vmem>>, %arg5: memref<16x1xf32, #tpu.memory_space<vmem>>) attributes {dimension_semantics = [#tpu.dimension_semantics<parallel>, #tpu.dimension_semantics<arbitrary>], iteration_bounds = array<i64: 1, 1>, scalar_prefetch = 0 : i64, scratch_operands = 2 : i64, tpu.core_type = #tpu.core_type<tc>, window_params = [{transform_indices = @transform_0, window_bounds = array<i64: 16, 256>}, {transform_indices = @transform_1, window_bounds = array<i64: 16, 2>}]} {
    %c0_i32 = arith.constant 0 : i32
    %0 = arith.cmpi eq, %arg1, %c0_i32 : i32
    %1 = arith.extui %0 : i1 to i32
    %c0_i32_0 = arith.constant 0 : i32
    %2 = arith.cmpi ne, %1, %c0_i32_0 : i32
    scf.if %2 {
      %cst_13 = arith.constant 0.000000e+00 : f32
      %19 = vector.broadcast %cst_13 : f32 to vector<16x1xf32>
      %c0_14 = arith.constant 0 : index
      %c0_15 = arith.constant 0 : index
      %20 = vector.load %arg4[%c0_14, %c0_15] : memref<16x1xf32, #tpu.memory_space<vmem>>, vector<16x1xf32>
      tpu.vector_store %arg4[%c0_14, %c0_15], %19 {strides = array<i32>} : memref<16x1xf32, #tpu.memory_space<vmem>>, vector<16x1xf32>,
      %cst_16 = arith.constant 0xFF800000 : f32
      %21 = vector.broadcast %cst_16 : f32 to vector<16x1xf32>
      %c0_17 = arith.constant 0 : index
      %c0_18 = arith.constant 0 : index
      %22 = vector.load %arg5[%c0_17, %c0_18] : memref<16x1xf32, #tpu.memory_space<vmem>>, vector<16x1xf32>
      tpu.vector_store %arg5[%c0_17, %c0_18], %21 {strides = array<i32>} : memref<16x1xf32, #tpu.memory_space<vmem>>, vector<16x1xf32>,
    } else {
    }
    %c0 = arith.constant 0 : index
    %c0_1 = arith.constant 0 : index
    %3 = vector.load %arg2[%c0, %c0_1] : memref<16x256xbf16, #tpu.memory_space<vmem>>, vector<16x256xbf16>
    %c0_2 = arith.constant 0 : index
    %c0_3 = arith.constant 0 : index
    %4 = vector.load %arg4[%c0_2, %c0_3] : memref<16x1xf32, #tpu.memory_space<vmem>>, vector<16x1xf32>
    %5 = arith.extf %3 : vector<16x256xbf16> to vector<16x256xf32>
    %cst = arith.constant dense<0.000000e+00> : vector<16xf32>
    %6 = vector.multi_reduction <add>, %5, %cst [1] : vector<16x256xf32> to vector<16xf32>
    %7 = vector.shape_cast %6 : vector<16xf32> to vector<16x1xf32>
    %8 = arith.addf %4, %7 : vector<16x1xf32>
    %c0_4 = arith.constant 0 : index
    %c0_5 = arith.constant 0 : index
    %9 = vector.load %arg4[%c0_4, %c0_5] : memref<16x1xf32, #tpu.memory_space<vmem>>, vector<16x1xf32>
    tpu.vector_store %arg4[%c0_4, %c0_5], %8 {strides = array<i32>} : memref<16x1xf32, #tpu.memory_space<vmem>>, vector<16x1xf32>,
    %c0_6 = arith.constant 0 : index
    %c0_7 = arith.constant 0 : index
    %10 = vector.load %arg5[%c0_6, %c0_7] : memref<16x1xf32, #tpu.memory_space<vmem>>, vector<16x1xf32>
    %cst_8 = arith.constant dense<0xFF80> : vector<16xbf16>
    %11 = vector.multi_reduction <maximumf>, %3, %cst_8 [1] : vector<16x256xbf16> to vector<16xbf16>
    %12 = vector.shape_cast %11 : vector<16xbf16> to vector<16x1xbf16>
    %13 = arith.extf %12 : vector<16x1xbf16> to vector<16x1xf32>
    %14 = arith.maximumf %10, %13 : vector<16x1xf32>
    %c0_9 = arith.constant 0 : index
    %c0_10 = arith.constant 0 : index
    %15 = vector.load %arg5[%c0_9, %c0_10] : memref<16x1xf32, #tpu.memory_space<vmem>>, vector<16x1xf32>
    tpu.vector_store %arg5[%c0_9, %c0_10], %14 {strides = array<i32>} : memref<16x1xf32, #tpu.memory_space<vmem>>, vector<16x1xf32>,
    %c0_i32_11 = arith.constant 0 : i32
    %16 = arith.cmpi eq, %arg1, %c0_i32_11 : i32
    %17 = arith.extui %16 : i1 to i32
    %c0_i32_12 = arith.constant 0 : i32
    %18 = arith.cmpi ne, %17, %c0_i32_12 : i32
    scf.if %18 {
      %c0_13 = arith.constant 0 : index
      %c0_14 = arith.constant 0 : index
      %19 = vector.load %arg4[%c0_13, %c0_14] : memref<16x1xf32, #tpu.memory_space<vmem>>, vector<16x1xf32>
      %cst_15 = arith.constant 3.906250e-03 : f32
      %20 = vector.broadcast %cst_15 : f32 to vector<16x1xf32>
      %21 = arith.mulf %19, %20 : vector<16x1xf32>
      %c0_16 = arith.constant 0 : index
      %c0_17 = arith.constant 0 : index
      %22 = vector.load %arg3[%c0_16, %c0_17] : memref<16x2xf32, #tpu.memory_space<vmem>>, vector<16x1xf32>
      tpu.vector_store %arg3[%c0_16, %c0_17], %21 {strides = array<i32>} : memref<16x2xf32, #tpu.memory_space<vmem>>, vector<16x1xf32>,
      %c0_18 = arith.constant 0 : index
      %c0_19 = arith.constant 0 : index
      %23 = vector.load %arg5[%c0_18, %c0_19] : memref<16x1xf32, #tpu.memory_space<vmem>>, vector<16x1xf32>
      %c0_20 = arith.constant 0 : index
      %c1 = arith.constant 1 : index
      %24 = vector.load %arg3[%c0_20, %c1] : memref<16x2xf32, #tpu.memory_space<vmem>>, vector<16x1xf32>
      tpu.vector_store %arg3[%c0_20, %c1], %23 {strides = array<i32>} : memref<16x2xf32, #tpu.memory_space<vmem>>, vector<16x1xf32>,
    } else {
    }
    return
  }
  func.func @transform_0(%arg0: i32, %arg1: i32) -> (i32, i32) {
    %c0_i32 = arith.constant 0 : i32
    return %arg0, %arg1 : i32, i32
  }
  func.func @transform_1(%arg0: i32, %arg1: i32) -> (i32, i32) {
    %c0_i32 = arith.constant 0 : i32
    %c0_i32_0 = arith.constant 0 : i32
    return %arg0, %c0_i32 : i32, i32
  }
}

</mosaic_0001>

<llo_original>
// kernel: tpu_custom_call.1
$region0: #{tpu_custom_call.1}
  #allocation0 [shape = 'u32[]', space=smem, size = 0x4, offset = 0x4, fixed_abs, tag = 'smem constant byte address 0x4 - core index']
  #allocation1 [shape = 'u32[144,128]{1,0:T(1,128)}', space=vmem, size = 0x12000, scoped, tag = 'internal scratch']
  #allocation2 [shape = 'f32[16,1]{1,0:T(8,128)}', space=vmem, size = 0x2000, scoped, tag = 'scratch operand']
  #allocation3 [shape = 'f32[16,1]{1,0:T(8,128)}', space=vmem, size = 0x2000, scoped, tag = 'scratch operand']
  %s0 = inlined_call_operand.hbm [shape: bf16[8,256], index: 0, kind: input, shape index: {}]
  %s1 = inlined_call_operand.hbm [shape: f32[8,2], index: 1, kind: output, shape index: {}]
  %s2 = sld [smem:[#allocation0]]
  $region26: #{tpu_custom_call.1} parent=0
    _
  %s4 = ssub.s32 1, %s2
  %s5 = scalar_select 0, %s4, %s2
  $region1: #{tpu_custom_call.1} parent=0
    #allocation4 [shape = 'u8[8192]{0}', space=vmem, size = 0x2000, scoped, tag = 'input window, operand 0, single buffered']
    #allocation5 [shape = 's32[1]{0}', space=sflag, size = 0x4, scoped, tag = 'scoped memory for tpu_custom_call.1']
    #allocation6 [shape = 's32[1]{0}', space=sflag, size = 0x4, scoped, tag = 'scoped memory for tpu_custom_call.1']
    #allocation7 [shape = 'u8[8192]{0}', space=vmem, size = 0x2000, scoped, tag = 'output window, operand 0, single buffered']
    %6 = vsyncpa [#allocation5], 0
    %7 = vsyncpa [#allocation6], 0
    // Predicated region
    $region2: #{tpu_custom_call.1} parent=1 // pred_check
      _
    $region3: #{tpu_custom_call.1} parent=1 // pred_check_branch
      %9 = sbr.rel (0) target = $region5
    $region4: #{tpu_custom_call.1} parent=1 // pred_region
      %s11 = ssub.s32 256, 128
      %12 = vsyncadd [#allocation5], %s11
      %s13 = sshll.u32 [#allocation4], 4
      %s14 = int_to_ptr.vmem [resolvable:$true] %s13
      %19 = dma.hbm_to_vmem [thread:$0]  %s0, 128, %s14, [#allocation5], 128, 128, 8
    $region5: #{tpu_custom_call.1} parent=1 // pred_fallthru
      _
    // Predicated region
    $region6: #{tpu_custom_call.1} parent=1 // pred_check
      _
    $region7: #{tpu_custom_call.1} parent=1 // pred_check_branch
      %21 = sbr.rel (0) target = $region9
    $region8: #{tpu_custom_call.1} parent=1 // pred_region
      %22 = dma.done [#allocation5], 256
    $region9: #{tpu_custom_call.1} parent=1 // pred_fallthru
      _
    %p23 = scmp.eq.s32.totalorder 0, 0
    // Predicated region
    $region10: #{tpu_custom_call.1} parent=1 // pred_check
      %p24 = pneg %p23
    $region11: #{tpu_custom_call.1} parent=1 // pred_check_branch
      %26 = sbr.rel (%p24) target = $region13
    $region12: #{tpu_custom_call.1} parent=1 // pred_region
      %vm27 = vcmask 7168
      %28 = vst.msk [vmem:[#allocation2] sm:$0xff] %vm27, 0.0
      %29 = vst.msk [vmem:[#allocation2 + $0x8] sm:$0xff] %vm27, 0.0
      %30 = vst.msk [vmem:[#allocation3] sm:$0xff] %vm27, -inf
      %31 = vst.msk [vmem:[#allocation3 + $0x8] sm:$0xff] %vm27, -inf
    $region13: #{tpu_custom_call.1} parent=1 // pred_fallthru
      _
    %v32 = vld [vmem:[#allocation4] sm:$0xff]
    %v33 = vld [vmem:[#allocation4 + $0x8] sm:$0xff]
    %v34 = vld [vmem:[#allocation2] sm:$0xff]
    %v35 = vld [vmem:[#allocation2 + $0x8] sm:$0xff]
    %v36 = vunpack.c.l.bf16 %v32
    %v37 = vunpack.c.h.bf16 %v32
    %v38 = vunpack.c.l.bf16 %v33
    %v39 = vunpack.c.h.bf16 %v33
    %v40 = vadd.f32 %v36, %v37
    %41 = vadd.xlane.f32.xlu0 %v40
    %v42 = vpop.xlane.xlu0 %41
    %v43 = vadd.f32 %v38, %v39
    %44 = vadd.xlane.f32.xlu0 %v43
    %v45 = vpop.xlane.xlu0 %44
    %v46 = vadd.f32 %v34, %v42
    %v47 = vadd.f32 %v35, %v45
    %vm48 = vcmask 7168
    %49 = vst.msk [vmem:[#allocation2] sm:$0xff] %vm48, %v46
    %50 = vst.msk [vmem:[#allocation2 + $0x8] sm:$0xff] %vm48, %v47
    %v51 = vld [vmem:[#allocation3] sm:$0xff]
    %v52 = vld [vmem:[#allocation3 + $0x8] sm:$0xff]
    %v55 = vunpack.c.l.b16 %v32
    %v56 = vunpack.c.h.b16 %v32
    %v57 = vunpack.c.l.b16 %v33
    %v58 = vunpack.c.h.b16 %v33
    %v59 = vpack.c.b16 %v57, %v55
    %v60 = vpack.c.b16 %v58, %v56
    %v63 = vmax.bf16 %v59, %v60
    %64 = vmax.xlane.bf16.xlu0 %v63
    %v65 = vpop.xlane.xlu0 %64
    %v66 = vunpack.c.l.bf16 %v65
    %v67 = vunpack.c.h.bf16 %v65
    %v68 = vmax.f32 %v51, %v66
    %v69 = vmax.f32 %v52, %v67
    %70 = vst.msk [vmem:[#allocation3] sm:$0xff] %vm48, %v68
    %71 = vst.msk [vmem:[#allocation3 + $0x8] sm:$0xff] %vm48, %v69
    // Predicated region
    $region14: #{tpu_custom_call.1} parent=1 // pred_check
      %p72 = pneg %p23
    $region15: #{tpu_custom_call.1} parent=1 // pred_check_branch
      %74 = sbr.rel (%p72) target = $region17
    $region16: #{tpu_custom_call.1} parent=1 // pred_region
      %v75 = vld [vmem:[#allocation2] sm:$0xff]
      %v76 = vld [vmem:[#allocation2 + $0x8] sm:$0xff]
      %v77 = vmul.f32 %v75, 0.00390625
      %v78 = vmul.f32 %v76, 0.00390625
      %79 = vst.msk [vmem:[#allocation7] sm:$0xff] %vm48, %v77
      %80 = vst.msk [vmem:[#allocation7 + $0x8] sm:$0xff] %vm48, %v78
      %v81 = vld [vmem:[#allocation3] sm:$0xff]
      %v82 = vld [vmem:[#allocation3 + $0x8] sm:$0xff]
      %85 = vrot.lane.b32.xlu0 %v81, 1
      %v86 = vpop.permute.xlu0 %85
      %87 = vrot.lane.b32.xlu0 %v82, 1
      %v88 = vpop.permute.xlu0 %87
      %vm91 = vcmask 15368
      %92 = vst.msk [vmem:[#allocation7] sm:$0xff] %vm91, %v86
      %93 = vst.msk [vmem:[#allocation7 + $0x8] sm:$0xff] %vm91, %v88
    $region17: #{tpu_custom_call.1} parent=1 // pred_fallthru
      _
    // Predicated region
    $region18: #{tpu_custom_call.1} parent=1 // pred_check
      _
    $region19: #{tpu_custom_call.1} parent=1 // pred_check_branch
      %95 = sbr.rel (0) target = $region21
    $region20: #{tpu_custom_call.1} parent=1 // pred_region
      %s97 = ssub.s32 256, 128
      %98 = vsyncadd [#allocation6], %s97
      %s99 = sshll.u32 [#allocation7], 4
      %s100 = int_to_ptr.vmem [resolvable:$true] %s99
      %105 = dma.vmem_to_hbm [thread:$0]  %s100, 128, %s1, [#allocation6], 128, 128, 8
    $region21: #{tpu_custom_call.1} parent=1 // pred_fallthru
      _
    // Predicated region
    $region22: #{tpu_custom_call.1} parent=1 // pred_check
      _
    $region23: #{tpu_custom_call.1} parent=1 // pred_check_branch
      %107 = sbr.rel (0) target = $region25
    $region24: #{tpu_custom_call.1} parent=1 // pred_region
      %108 = dma.done [#allocation6], 256
    $region25: #{tpu_custom_call.1} parent=1 // pred_fallthru
      _
    %109 = vsyncpa [#allocation5], 1
    %110 = vsyncpa [#allocation6], 1

</llo_original>
